<compile_context>
chip_gen: v6e
topology: v6e:2x2x1
jax: 0.10.0
libtpu: 0.0.40
codegen_flags: <defaults>
</compile_context>

<pallas_src>
import math

import jax
import jax.numpy as jnp
from jax.experimental import pallas as pl
from jax.experimental.pallas import tpu as pltpu


def _erf_f32(x):
    """erf via Abramowitz & Stegun 7.1.26 (max abs error ~1.5e-7)."""
    a1 = 0.254829592
    a2 = -0.284496736
    a3 = 1.421413741
    a4 = -1.453152027
    a5 = 1.061405429
    p = 0.3275911
    sign = jnp.where(x < 0.0, -1.0, 1.0)
    ax = jnp.abs(x)
    t = 1.0 / (1.0 + p * ax)
    poly = ((((a5 * t + a4) * t + a3) * t + a2) * t + a1) * t
    return sign * (1.0 - poly * jnp.exp(-ax * ax))


def _gelu_exact(x):
    # erf-based "exact" GELU (BERT default hidden_act="gelu").
    return 0.5 * x * (1.0 + _erf_f32(x * (1.0 / math.sqrt(2.0))))


def _bert_intermediate_kernel(x_ref, w_ref, b_ref, o_ref):
    # x_ref: (tm, H), w_ref: (H, tn), b_ref: (1, tn), o_ref: (tm, tn)
    acc = jnp.dot(x_ref[...], w_ref[...], preferred_element_type=jnp.float32)
    acc = acc + b_ref[...].astype(jnp.float32)
    o_ref[...] = _gelu_exact(acc).astype(o_ref.dtype)


def _round_up(x, m):
    return (x + m - 1) // m * m


def bert_intermediate_pallas(hidden_states, weight, bias, *,
                             block_rows=256, block_cols=512):
    """Fused y = gelu(x @ W^T + b)  (BertIntermediate.forward).

    hidden_states: (B, S, H); weight: (I, H) torch nn.Linear layout; bias: (I,).
    Returns (B, S, I) in hidden_states.dtype.
    """
    B, S, H = hidden_states.shape
    I = weight.shape[0]
    assert weight.shape == (I, H) and bias.shape == (I,)

    M = B * S
    x2 = hidden_states.reshape(M, H)

    # Row tile: large, sublane-aligned (multiple of 8); pad rows if needed.
    tm = block_rows if M >= block_rows else _round_up(M, 8)
    Mp = _round_up(M, tm)
    if Mp != M:
        x2 = jnp.pad(x2, ((0, Mp - M), (0, 0)))

    # Output-column tile: lane-dense (multiple of 128) so stores are unmasked vst.
    if I % 128 == 0:
        tn = 128
        for cand in (block_cols, 512, 256, 128):
            if cand % 128 == 0 and I % cand == 0:
                tn = cand
                break
    else:
        tn = I  # full-dim block is always legal

    # One-time parameter-side transform: (I, H) -> (H, I) so the MXU contracts
    # over the leading dim of the weight slab. XLA does this once per weight.
    w_t = weight.T
    b2 = bias.reshape(1, I)

    grid = (Mp // tm, I // tn)

    out = pl.pallas_call(
        _bert_intermediate_kernel,
        grid_spec=pltpu.PrefetchScalarGridSpec(
            num_scalar_prefetch=0,
            grid=grid,
            in_specs=[
                pl.BlockSpec((tm, H), lambda i, j: (i, 0)),   # activations
                pl.BlockSpec((H, tn), lambda i, j: (0, j)),   # weight slab
                pl.BlockSpec((1, tn), lambda i, j: (0, j)),   # bias slab
            ],
            out_specs=pl.BlockSpec((tm, tn), lambda i, j: (i, j)),
        ),
        out_shape=jax.ShapeDtypeStruct((Mp, I), hidden_states.dtype),
        compiler_params=pltpu.CompilerParams(
            dimension_semantics=("parallel", "parallel"),
        ),
    )(x2, w_t, b2)

    return out[:M].reshape(B, S, I)


def bert_intermediate_ref(hidden_states, weight, bias):
    y = jnp.einsum("bsh,ih->bsi", hidden_states, weight,
                   precision=jax.lax.Precision.HIGHEST) + bias
    return jax.nn.gelu(y, approximate=False)


if __name__ == "__main__":
    # Small config consistent with the module: hidden=32, intermediate=4*hidden.
    hidden_size = 32
    intermediate_size = 128
    B, S = 2, 8

    key = jax.random.PRNGKey(0)
    kx, kw, kb = jax.random.split(key, 3)
    x = jax.random.normal(kx, (B, S, hidden_size), jnp.float32)
    weight = 0.05 * jax.random.normal(kw, (intermediate_size, hidden_size), jnp.float32)
    bias = 0.05 * jax.random.normal(kb, (intermediate_size,), jnp.float32)

    out = bert_intermediate_pallas(x, weight, bias)
    out = jax.block_until_ready(out)

    ref = bert_intermediate_ref(x, weight, bias)
    assert out.shape == (B, S, intermediate_size)
    max_err = float(jnp.max(jnp.abs(out - ref)))
    assert jnp.allclose(out, ref, atol=5e-5, rtol=5e-5), f"mismatch vs reference, max err {max_err}"

    print("KERNEL_OK")
</pallas_src>

<mosaic_0001>
module attributes {stable_mosaic.version = 11 : i64} {
  func.func @_bert_intermediate_kernel(%arg0: i32, %arg1: i32, %arg2: memref<16x32xf32, #tpu.memory_space<vmem>>, %arg3: memref<32x128xf32, #tpu.memory_space<vmem>>, %arg4: memref<1x128xf32, #tpu.memory_space<vmem>>, %arg5: memref<16x128xf32, #tpu.memory_space<vmem>>) attributes {dimension_semantics = [#tpu.dimension_semantics<parallel>, #tpu.dimension_semantics<parallel>], iteration_bounds = array<i64: 1, 1>, scalar_prefetch = 0 : i64, scratch_operands = 0 : i64, tpu.core_type = #tpu.core_type<tc>, window_params = [{transform_indices = @transform_0, window_bounds = array<i64: 16, 32>}, {transform_indices = @transform_1, window_bounds = array<i64: 32, 128>}, {transform_indices = @transform_2, window_bounds = array<i64: 1, 128>}, {transform_indices = @transform_3, window_bounds = array<i64: 16, 128>}]} {
    %c0 = arith.constant 0 : index
    %c0_0 = arith.constant 0 : index
    %0 = vector.load %arg2[%c0, %c0_0] : memref<16x32xf32, #tpu.memory_space<vmem>>, vector<16x32xf32>
    %c0_1 = arith.constant 0 : index
    %c0_2 = arith.constant 0 : index
    %1 = vector.load %arg3[%c0_1, %c0_2] : memref<32x128xf32, #tpu.memory_space<vmem>>, vector<32x128xf32>
    %cst = arith.constant dense<0.000000e+00> : vector<16x128xf32>
    %2 = tpu.matmul %0, %1, %cst {dimension_numbers = #tpu.dot_dimension_numbers<[1], [0], [0], [1], [0, 0, 1, 1], [], []>} : vector<16x32xf32>, vector<32x128xf32>, vector<16x128xf32> -> vector<16x128xf32>
    %c0_3 = arith.constant 0 : index
    %c0_4 = arith.constant 0 : index
    %3 = vector.load %arg4[%c0_3, %c0_4] : memref<1x128xf32, #tpu.memory_space<vmem>>, vector<1x128xf32>
    %4 = vector.broadcast %3 : vector<1x128xf32> to vector<16x128xf32>
    %5 = arith.addf %2, %4 : vector<16x128xf32>
    %cst_5 = arith.constant 5.000000e-01 : f32
    %6 = vector.broadcast %cst_5 : f32 to vector<16x128xf32>
    %7 = arith.mulf %6, %5 : vector<16x128xf32>
    %cst_6 = arith.constant 0.707106769 : f32
    %8 = vector.broadcast %cst_6 : f32 to vector<16x128xf32>
    %9 = arith.mulf %5, %8 : vector<16x128xf32>
    %cst_7 = arith.constant 0.000000e+00 : f32
    %10 = vector.broadcast %cst_7 : f32 to vector<16x128xf32>
    %11 = arith.cmpf olt, %9, %10 : vector<16x128xf32>
    %cst_8 = arith.constant -1.000000e+00 : f32
    %cst_9 = arith.constant 1.000000e+00 : f32
    %12 = vector.broadcast %cst_8 : f32 to vector<16x128xf32>
    %13 = vector.broadcast %cst_9 : f32 to vector<16x128xf32>
    %14 = arith.select %11, %12, %13 : vector<16x128xi1>, vector<16x128xf32>
    %15 = math.absf %9 : vector<16x128xf32>
    %cst_10 = arith.constant 0.327591091 : f32
    %16 = vector.broadcast %cst_10 : f32 to vector<16x128xf32>
    %17 = arith.mulf %16, %15 : vector<16x128xf32>
    %cst_11 = arith.constant 1.000000e+00 : f32
    %18 = vector.broadcast %cst_11 : f32 to vector<16x128xf32>
    %19 = arith.addf %18, %17 : vector<16x128xf32>
    %cst_12 = arith.constant 1.000000e+00 : f32
    %20 = vector.broadcast %cst_12 : f32 to vector<16x128xf32>
    %21 = arith.divf %20, %19 : vector<16x128xf32>
    %cst_13 = arith.constant 1.06140542 : f32
    %22 = vector.broadcast %cst_13 : f32 to vector<16x128xf32>
    %23 = arith.mulf %22, %21 : vector<16x128xf32>
    %cst_14 = arith.constant -1.45315206 : f32
    %24 = vector.broadcast %cst_14 : f32 to vector<16x128xf32>
    %25 = arith.addf %23, %24 : vector<16x128xf32>
    %26 = arith.mulf %25, %21 : vector<16x128xf32>
    %cst_15 = arith.constant 1.42141378 : f32
    %27 = vector.broadcast %cst_15 : f32 to vector<16x128xf32>
    %28 = arith.addf %26, %27 : vector<16x128xf32>
    %29 = arith.mulf %28, %21 : vector<16x128xf32>
    %cst_16 = arith.constant -0.284496725 : f32
    %30 = vector.broadcast %cst_16 : f32 to vector<16x128xf32>
    %31 = arith.addf %29, %30 : vector<16x128xf32>
    %32 = arith.mulf %31, %21 : vector<16x128xf32>
    %cst_17 = arith.constant 0.254829586 : f32
    %33 = vector.broadcast %cst_17 : f32 to vector<16x128xf32>
    %34 = arith.addf %32, %33 : vector<16x128xf32>
    %35 = arith.mulf %34, %21 : vector<16x128xf32>
    %cst_18 = arith.constant 0.000000e+00 : f32
    %36 = vector.broadcast %cst_18 : f32 to vector<16x128xf32>
    %37 = arith.subf %36, %15 : vector<16x128xf32>
    %38 = arith.mulf %37, %15 : vector<16x128xf32>
    %39 = math.exp %38 : vector<16x128xf32>
    %40 = arith.mulf %35, %39 : vector<16x128xf32>
    %cst_19 = arith.constant 1.000000e+00 : f32
    %41 = vector.broadcast %cst_19 : f32 to vector<16x128xf32>
    %42 = arith.subf %41, %40 : vector<16x128xf32>
    %43 = arith.mulf %14, %42 : vector<16x128xf32>
    %cst_20 = arith.constant 1.000000e+00 : f32
    %44 = vector.broadcast %cst_20 : f32 to vector<16x128xf32>
    %45 = arith.addf %44, %43 : vector<16x128xf32>
    %46 = arith.mulf %7, %45 : vector<16x128xf32>
    %c0_21 = arith.constant 0 : index
    %c0_22 = arith.constant 0 : index
    %47 = vector.load %arg5[%c0_21, %c0_22] : memref<16x128xf32, #tpu.memory_space<vmem>>, vector<16x128xf32>
    tpu.vector_store %arg5[%c0_21, %c0_22], %46 {strides = array<i32>} : memref<16x128xf32, #tpu.memory_space<vmem>>, vector<16x128xf32>,
    return
  }
  func.func @transform_0(%arg0: i32, %arg1: i32) -> (i32, i32) {
    %c0_i32 = arith.constant 0 : i32
    %c0_i32_0 = arith.constant 0 : i32
    return %arg0, %c0_i32 : i32, i32
  }
  func.func @transform_1(%arg0: i32, %arg1: i32) -> (i32, i32) {
    %c0_i32 = arith.constant 0 : i32
    %c0_i32_0 = arith.constant 0 : i32
    return %c0_i32, %arg1 : i32, i32
  }
  func.func @transform_2(%arg0: i32, %arg1: i32) -> (i32, i32) {
    %c0_i32 = arith.constant 0 : i32
    %c0_i32_0 = arith.constant 0 : i32
    return %c0_i32, %arg1 : i32, i32
  }
  func.func @transform_3(%arg0: i32, %arg1: i32) -> (i32, i32) {
    %c0_i32 = arith.constant 0 : i32
    return %arg0, %arg1 : i32, i32
  }
}

</mosaic_0001>

<llo_original>
// kernel: tpu_custom_call.1
$region0: #{tpu_custom_call.1}
  #allocation0 [shape = 'u32[]', space=smem, size = 0x4, offset = 0x4, fixed_abs, tag = 'smem constant byte address 0x4 - core index']
  #allocation1 [shape = 'u32[144,128]{1,0:T(1,128)}', space=vmem, size = 0x12000, scoped, tag = 'internal scratch']
  %s0 = inlined_call_operand.hbm [shape: f32[16,32], index: 0, kind: input, shape index: {}]
  %s1 = inlined_call_operand.hbm [shape: f32[32,128], index: 1, kind: input, shape index: {}]
  %s2 = inlined_call_operand.vmem [shape: f32[1,128], index: 2, kind: input, shape index: {}]
  %s3 = inlined_call_operand.hbm [shape: f32[16,128], index: 3, kind: output, shape index: {}]
  %s4 = sld [smem:[#allocation0]]
  $region30: #{tpu_custom_call.1} parent=0
    _
  %s6 = ssub.s32 1, %s4
  %s7 = scalar_select 0, %s6, %s4
  $region1: #{tpu_custom_call.1} parent=0
    #allocation2 [shape = 'u8[8192]{0}', space=vmem, size = 0x2000, scoped, tag = 'input window, operand 0, single buffered']
    #allocation3 [shape = 's32[1]{0}', space=sflag, size = 0x4, scoped, tag = 'scoped memory for tpu_custom_call.1']
    #allocation4 [shape = 's32[1]{0}', space=sflag, size = 0x4, scoped, tag = 'scoped memory for tpu_custom_call.1']
    #allocation5 [shape = 'u8[16384]{0}', space=vmem, size = 0x4000, scoped, tag = 'input window, operand 1, single buffered']
    #allocation6 [shape = 's32[1]{0}', space=sflag, size = 0x4, scoped, tag = 'scoped memory for tpu_custom_call.1']
    #allocation7 [shape = 'u8[8192]{0}', space=vmem, size = 0x2000, scoped, tag = 'output window, operand 0, single buffered']
    %8 = vsyncpa [#allocation3], 0
    %9 = vsyncpa [#allocation6], 0
    %10 = vsyncpa [#allocation4], 0
    // Predicated region
    $region2: #{tpu_custom_call.1} parent=1 // pred_check
      _
    $region3: #{tpu_custom_call.1} parent=1 // pred_check_branch
      %12 = sbr.rel (0) target = $region5
    $region4: #{tpu_custom_call.1} parent=1 // pred_region
      %s14 = ssub.s32 256, 256
      %15 = vsyncadd [#allocation3], %s14
      %s16 = sshll.u32 [#allocation2], 4
      %s17 = int_to_ptr.vmem [resolvable:$true] %s16
      %22 = dma.hbm_to_vmem [thread:$0]  %s0, 256, %s17, [#allocation3], 128, 128, 8
    $region5: #{tpu_custom_call.1} parent=1 // pred_fallthru
      _
    // Predicated region
    $region6: #{tpu_custom_call.1} parent=1 // pred_check
      _
    $region7: #{tpu_custom_call.1} parent=1 // pred_check_branch
      %24 = sbr.rel (0) target = $region9
    $region8: #{tpu_custom_call.1} parent=1 // pred_region
      %s26 = ssub.s32 512, 512
      %27 = vsyncadd [#allocation6], %s26
      %s28 = sshll.u32 [#allocation5], 4
      %s29 = int_to_ptr.vmem [resolvable:$true] %s28
      %34 = dma.hbm_to_vmem [thread:$0]  %s1, 512, %s29, [#allocation6], 128, 128, 8
    $region9: #{tpu_custom_call.1} parent=1 // pred_fallthru
      _
    // Predicated region
    $region10: #{tpu_custom_call.1} parent=1 // pred_check
      _
    $region11: #{tpu_custom_call.1} parent=1 // pred_check_branch
      %36 = sbr.rel (0) target = $region13
    $region12: #{tpu_custom_call.1} parent=1 // pred_region
      _
    $region13: #{tpu_custom_call.1} parent=1 // pred_fallthru
      _
    // Predicated region
    $region14: #{tpu_custom_call.1} parent=1 // pred_check
      _
    $region15: #{tpu_custom_call.1} parent=1 // pred_check_branch
      %38 = sbr.rel (0) target = $region17
    $region16: #{tpu_custom_call.1} parent=1 // pred_region
      %39 = dma.done [#allocation3], 256
    $region17: #{tpu_custom_call.1} parent=1 // pred_fallthru
      _
    // Predicated region
    $region18: #{tpu_custom_call.1} parent=1 // pred_check
      _
    $region19: #{tpu_custom_call.1} parent=1 // pred_check_branch
      %41 = sbr.rel (0) target = $region21
    $region20: #{tpu_custom_call.1} parent=1 // pred_region
      %42 = dma.done [#allocation6], 512
    $region21: #{tpu_custom_call.1} parent=1 // pred_fallthru
      _
    %v43 = vld [vmem:[#allocation2] sm:$0xff]
    %v44 = vld [vmem:[#allocation2 + $0x8] sm:$0xff]
    %v45 = vld [vmem:[#allocation5] sm:$0xff]
    %v46 = vld [vmem:[#allocation5 + $0x8] sm:$0xff]
    %v47 = vld [vmem:[#allocation5 + $0x10] sm:$0xff]
    %v48 = vld [vmem:[#allocation5 + $0x18] sm:$0xff]
    %v49 = vld [vmem:[%s2] sm:$0x1]
    %v51 = vlaneseq
    %v52 = vshrl.u32 %v51, 7
    %v53 = vsub.s32 0, %v52
    %v54 = vrot.slane %v49, %v53
    %vm56 = vcmask 261120
    %v58 = vsel %vm56, %v43, 0
    %v61 = vsel %vm56, %v44, 0
    %63 = vmatprep.subr.mxu0 0.0
    %64 = vmatpush1.msra.mxu0 0.0
    %65 = vmatprep.subr.mxu0 0.0
    %66 = vmatpush1.msra.mxu0 0.0
    %67 = vmatprep.subr.mxu0 0.0
    %68 = vmatpush1.msra.mxu0 0.0
    %69 = vmatprep.subr.mxu0 0.0
    %70 = vmatpush1.msra.mxu0 0.0
    %71 = vmatprep.subr.mxu0 0.0
    %72 = vmatpush1.msra.mxu0 0.0
    %73 = vmatprep.subr.mxu0 0.0
    %74 = vmatpush1.msra.mxu0 0.0
    %75 = vmatprep.subr.mxu0 0.0
    %76 = vmatpush1.msra.mxu0 0.0
    %77 = vmatprep.subr.mxu0 0.0
    %78 = vmatpush1.msra.mxu0 0.0
    %79 = vmatprep.subr.mxu0 0.0
    %80 = vmatpush1.msra.mxu0 0.0
    %81 = vmatprep.subr.mxu0 0.0
    %82 = vmatpush1.msra.mxu0 0.0
    %83 = vmatprep.subr.mxu0 0.0
    %84 = vmatpush1.msra.mxu0 0.0
    %85 = vmatprep.subr.mxu0 0.0
    %86 = vmatpush1.msra.mxu0 0.0
    %87 = vmatprep.subr.mxu0 0.0
    %88 = vmatpush1.msra.mxu0 %v48
    %89 = vmatprep.subr.mxu0 0.0
    %90 = vmatpush1.msra.mxu0 %v47
    %91 = vmatprep.subr.mxu0 0.0
    %92 = vmatpush1.msra.mxu0 %v46
    %93 = vmatprep.subr.mxu0 0.0
    %94 = vmatpush1.msra.mxu0 %v45
    %95 = vmatprep.subr.mxu0 0.0
    %96 = vmatpush2.msra.mxu0 0.0
    %97 = vmatprep.subr.mxu0 0.0
    %98 = vmatpush2.msra.mxu0 0.0
    %99 = vmatprep.subr.mxu0 0.0
    %100 = vmatpush2.msra.mxu0 0.0
    %101 = vmatprep.subr.mxu0 0.0
    %102 = vmatpush2.msra.mxu0 0.0
    %103 = vmatprep.subr.mxu0 0.0
    %104 = vmatpush2.msra.mxu0 0.0
    %105 = vmatprep.subr.mxu0 0.0
    %106 = vmatpush2.msra.mxu0 0.0
    %107 = vmatprep.subr.mxu0 0.0
    %108 = vmatpush2.msra.mxu0 0.0
    %109 = vmatprep.subr.mxu0 0.0
    %110 = vmatpush2.msra.mxu0 0.0
    %111 = vmatprep.subr.mxu0 0.0
    %112 = vmatpush2.msra.mxu0 0.0
    %113 = vmatprep.subr.mxu0 0.0
    %114 = vmatpush2.msra.mxu0 0.0
    %115 = vmatprep.subr.mxu0 0.0
    %116 = vmatpush2.msra.mxu0 0.0
    %117 = vmatprep.subr.mxu0 0.0
    %118 = vmatpush2.msra.mxu0 0.0
    %119 = vmatprep.subr.mxu0 0.0
    %120 = vmatpush2.msra.mxu0 0.0
    %121 = vmatprep.subr.mxu0 0.0
    %122 = vmatpush2.msra.mxu0 0.0
    %123 = vmatprep.subr.mxu0 0.0
    %124 = vmatpush2.msra.mxu0 0.0
    %125 = vmatprep.subr.mxu0 0.0
    %126 = vmatpush2.msra.mxu0 0.0
    %127 = vmatprep.mubr.f32.mxu0 0.0
    %128 = vmatmul.mubr.f32.gmra.mxu0 %v58
    %v129 = vpop.f32.mrf.mxu0
    %v130 = vadd.f32 %v54, %v129
    %v131 = vpop.f32.mrf.mxu0
    %132 = vmatprep.mubr.f32.mxu0 0.0
    %133 = vmatmul.mubr.f32.gmra.mxu0 %v61
    %v134 = vpop.f32.mrf.mxu0
    %v135 = vadd.f32 %v54, %v134
    %v136 = vpop.f32.mrf.mxu0
    %137 = vdwg.mxu0
    %v138 = vmul.f32 %v130, 0.5
    %v139 = vmul.f32 %v135, 0.5
    %v140 = vmul.f32 %v130, 0.70710677
    %v141 = vmul.f32 %v135, 0.70710677
    %vm142 = vcmp.lt.f32.partialorder %v140, 0.0
    %vm143 = vcmp.lt.f32.partialorder %v141, 0.0
    %v144 = vsel %vm142, -1.0, 1.0
    %v145 = vsel %vm143, -1.0, 1.0
    %v146 = vand.u32 2147483647, %v140
    %v147 = vand.u32 2147483647, %v141
    %v148 = vmul.f32 %v146, 0.3275911
    %v149 = vmul.f32 %v147, 0.3275911
    %v150 = vadd.f32 %v148, 1.0
    %v151 = vadd.f32 %v149, 1.0
    %v152 = vrcp.pop %v150
    %v153 = vmul.f32 1.0, %v152
    %v154 = vrcp.pop %v151
    %v155 = vmul.f32 1.0, %v154
    %v156 = vmul.f32 %v153, 1.0614054
    %v157 = vmul.f32 %v155, 1.0614054
    %v158 = vadd.f32 %v156, -1.4531521
    %v159 = vadd.f32 %v157, -1.4531521
    %v160 = vmul.f32 %v158, %v153
    %v161 = vmul.f32 %v159, %v155
    %v162 = vadd.f32 %v160, 1.4214138
    %v163 = vadd.f32 %v161, 1.4214138
    %v164 = vmul.f32 %v162, %v153
    %v165 = vmul.f32 %v163, %v155
    %v166 = vadd.f32 %v164, -0.28449672
    %v167 = vadd.f32 %v165, -0.28449672
    %v168 = vmul.f32 %v166, %v153
    %v169 = vmul.f32 %v167, %v155
    %v170 = vadd.f32 %v168, 0.2548296
    %v171 = vadd.f32 %v169, 0.2548296
    %v172 = vmul.f32 %v170, %v153
    %v173 = vmul.f32 %v171, %v155
    %v174 = vsub.f32 0.0, %v146
    %v175 = vsub.f32 0.0, %v147
    %v176 = vmul.f32 %v174, %v146
    %v177 = vmul.f32 %v175, %v147
    %v178 = vmul.f32 %v176, 1.442695
    %v179 = vpow.pop %v178
    %v180 = vmul.f32 %v177, 1.442695
    %v181 = vpow.pop %v180
    %v182 = vmul.f32 %v172, %v179
    %v183 = vmul.f32 %v173, %v181
    %v184 = vsub.f32 1.0, %v182
    %v185 = vsub.f32 1.0, %v183
    %v186 = vmul.f32 %v144, %v184
    %v187 = vmul.f32 %v145, %v185
    %v188 = vadd.f32 %v186, 1.0
    %v189 = vadd.f32 %v187, 1.0
    %v190 = vmul.f32 %v138, %v188
    %v191 = vmul.f32 %v139, %v189
    %192 = vst [vmem:[#allocation7] sm:$0xff] %v190
    %193 = vst [vmem:[#allocation7 + $0x8] sm:$0xff] %v191
    // Predicated region
    $region22: #{tpu_custom_call.1} parent=1 // pred_check
      _
    $region23: #{tpu_custom_call.1} parent=1 // pred_check_branch
      %195 = sbr.rel (0) target = $region25
    $region24: #{tpu_custom_call.1} parent=1 // pred_region
      %s197 = ssub.s32 256, 256
      %198 = vsyncadd [#allocation4], %s197
      %s199 = sshll.u32 [#allocation7], 4
      %s200 = int_to_ptr.vmem [resolvable:$true] %s199
      %205 = dma.vmem_to_hbm [thread:$0]  %s200, 256, %s3, [#allocation4], 128, 128, 8
    $region25: #{tpu_custom_call.1} parent=1 // pred_fallthru
      _
    // Predicated region
    $region26: #{tpu_custom_call.1} parent=1 // pred_check
      _
    $region27: #{tpu_custom_call.1} parent=1 // pred_check_branch
      %207 = sbr.rel (0) target = $region29
    $region28: #{tpu_custom_call.1} parent=1 // pred_region
      %208 = dma.done [#allocation4], 256
    $region29: #{tpu_custom_call.1} parent=1 // pred_fallthru
      _
    %209 = vsyncpa [#allocation3], 1
    %210 = vsyncpa [#allocation6], 1
    %211 = vsyncpa [#allocation4], 1

</llo_original>
